<compile_context>
chip_gen: v5e
topology: v5e:2x2
jax: 0.10.0
libtpu: 0.0.40
codegen_flags: <defaults>
</compile_context>

<pallas_src>
import functools
import math

import jax
import jax.numpy as jnp
from jax.experimental import pallas as pl
from jax.experimental.pallas import tpu as pltpu


# -----------------------------------------------------------------------------
# helpers
# -----------------------------------------------------------------------------
def _layer_norm(x, g, b, eps=1e-5):
    mu = jnp.mean(x, axis=-1, keepdims=True)
    var = jnp.mean((x - mu) ** 2, axis=-1, keepdims=True)
    return (x - mu) * jax.lax.rsqrt(var + eps) * g + b


# -----------------------------------------------------------------------------
# fused transformer stack kernel (grid = (num_layers,))
# -----------------------------------------------------------------------------
def transformer_stack_kernel(mask_ref, x0_ref,
                             ln1_g_ref, ln1_b_ref,
                             wq_ref, wk_ref, wv_ref,
                             bq_ref, bk_ref, bv_ref,
                             wo_ref, bo_ref,
                             ln2_g_ref, ln2_b_ref,
                             wfc_ref, bfc_ref, wproj_ref, bproj_ref,
                             x_ref, *, num_heads):
    """All CLIP ResidualAttentionBlocks; activation resident across layers."""
    @pl.when(pl.program_id(0) == 0)
    def _():
        x_ref[...] = x0_ref[...]

    x = x_ref[...]                       # (B, L, D) float32, VMEM-resident
    B, L, D = x.shape
    H = num_heads
    HD = D // H
    G = B * H
    scale = 1.0 / math.sqrt(HD)

    # ---- pre-LN (f32) then bf16 for the MXU ----
    xn = _layer_norm(x, ln1_g_ref[0], ln1_b_ref[0]).astype(jnp.bfloat16)

    # ---- batched multi-head attention ----
    # group axis g = b*H + h: activations broadcast over heads, per-head
    # weights broadcast over batch -> every matmul is one batched einsum.
    xg = jnp.broadcast_to(xn[:, None], (B, H, L, D)).reshape(G, L, D)

    def proj(w_ref, b_ref):
        w = jnp.broadcast_to(w_ref[0][None], (B, H, D, HD)).reshape(G, D, HD)
        y = jnp.einsum('gld,gde->gle', xg, w,
                       preferred_element_type=jnp.float32)
        bias = jnp.broadcast_to(b_ref[0][None], (B, H, 1, HD)).reshape(G, 1, HD)
        return y + bias                                  # (G, L, HD) f32

    q = proj(wq_ref, bq_ref)
    k = proj(wk_ref, bk_ref)
    v = proj(wv_ref, bv_ref)

    s = jnp.einsum('gld,gmd->glm', q.astype(jnp.bfloat16),
                   k.astype(jnp.bfloat16),
                   preferred_element_type=jnp.float32) * scale
    s = s + mask_ref[...]                                # causal mask (L, L)
    s = s - jnp.max(s, axis=-1, keepdims=True)
    p = jnp.exp(s)
    p = p * pl.reciprocal(jnp.sum(p, axis=-1, keepdims=True), approx=True)

    og = jnp.einsum('glm,gmd->gld', p.astype(jnp.bfloat16),
                    v.astype(jnp.bfloat16),
                    preferred_element_type=jnp.float32)  # (G, L, HD)

    # head merge folded into the output projection: sum_h o_h @ Wo_h
    wo = jnp.broadcast_to(wo_ref[0][None], (B, H, HD, D)).reshape(G, HD, D)
    attn = jnp.einsum('gle,ged->gld', og.astype(jnp.bfloat16), wo,
                      preferred_element_type=jnp.float32)  # (G, L, D)
    attn = jnp.sum(attn.reshape(B, H, L, D), axis=1) + bo_ref[0]
    x = x + attn

    # ---- MLP: c_fc -> QuickGELU -> c_proj, + residual ----
    xn2 = _layer_norm(x, ln2_g_ref[0], ln2_b_ref[0]).astype(jnp.bfloat16)
    h1 = jnp.dot(xn2.reshape(B * L, D), wfc_ref[0],
                 preferred_element_type=jnp.float32) + bfc_ref[0]
    h1 = h1 * jax.nn.sigmoid(1.702 * h1)                 # QuickGELU (f32)
    h2 = jnp.dot(h1.astype(jnp.bfloat16), wproj_ref[0],
                 preferred_element_type=jnp.float32) + bproj_ref[0]
    x_ref[...] = x + h2.reshape(B, L, D)


def run_transformer(x0, mask, stacked, *, num_heads, num_layers):
    B, L, D = x0.shape
    H = num_heads
    HD = D // H

    def wspec(shape):
        nd = len(shape)
        return pl.BlockSpec((1,) + shape, lambda l, nd=nd: (l,) + (0,) * nd)

    mask_spec = pl.BlockSpec((L, L), lambda l: (0, 0))
    x_spec = pl.BlockSpec((B, L, D), lambda l: (0, 0, 0))

    in_specs = [
        mask_spec,                                       # mask (resident)
        x_spec,                                          # x0 (read at l==0)
        wspec((1, D)), wspec((1, D)),                    # ln1 g, b
        wspec((H, D, HD)), wspec((H, D, HD)), wspec((H, D, HD)),   # wq wk wv
        wspec((H, 1, HD)), wspec((H, 1, HD)), wspec((H, 1, HD)),   # bq bk bv
        wspec((H, HD, D)), wspec((1, D)),                # wo, bo
        wspec((1, D)), wspec((1, D)),                    # ln2 g, b
        wspec((D, 4 * D)), wspec((1, 4 * D)),            # wfc, bfc
        wspec((4 * D, D)), wspec((1, D)),                # wproj, bproj
    ]

    kernel = functools.partial(transformer_stack_kernel, num_heads=num_heads)
    return pl.pallas_call(
        kernel,
        out_shape=jax.ShapeDtypeStruct((B, L, D), jnp.float32),
        grid=(num_layers,),
        in_specs=in_specs,
        out_specs=x_spec,
        compiler_params=pltpu.CompilerParams(
            dimension_semantics=("arbitrary",),          # layers are sequential
            vmem_limit_bytes=48 * 1024 * 1024),          # fits v7x's 64 MiB VMEM
    )(mask, x0, *stacked)


# -----------------------------------------------------------------------------
# vision tower + text head kernels (tiny; whole-array VMEM blocks)
# -----------------------------------------------------------------------------
def vision_kernel(patch_ref, wpatch_ref, bpatch_ref, wproj_ref, o_ref):
    """Synthetic vision tower: patch-embed -> mean-pool -> image_projection."""
    p = patch_ref[...]                   # (B, P, PD) f32
    B, P, PD = p.shape
    Vw = wpatch_ref.shape[1]
    feat = jnp.dot(p.reshape(B * P, PD).astype(jnp.bfloat16), wpatch_ref[...],
                   preferred_element_type=jnp.float32) + bpatch_ref[...]
    pooled = jnp.mean(feat.reshape(B, P, Vw), axis=1)    # (B, Vw) f32
    o_ref[...] = jnp.dot(pooled.astype(jnp.bfloat16), wproj_ref[...],
                         preferred_element_type=jnp.float32)


def text_head_kernel(xe_ref, g_ref, b_ref, wt_ref, o_ref):
    """ln_final on the gathered EOT rows + text_projection."""
    xe = _layer_norm(xe_ref[...], g_ref[...], b_ref[...])   # (B, D) f32
    o_ref[...] = jnp.dot(xe.astype(jnp.bfloat16), wt_ref[...],
                         preferred_element_type=jnp.float32)


def _call(kernel, out_shape, *args):
    return pl.pallas_call(
        kernel,
        out_shape=out_shape,
        in_specs=[pl.BlockSpec(memory_space=pltpu.MemorySpace.VMEM)] * len(args),
        out_specs=pl.BlockSpec(memory_space=pltpu.MemorySpace.VMEM),
    )(*args)


# -----------------------------------------------------------------------------
# parameters (matches CLIP.initialize_parameters stds); weights stored bf16
# -----------------------------------------------------------------------------
def init_clip_params(key, *, embed_dim, vision_width, context_length, vocab_size,
                     transformer_width, transformer_heads, transformer_layers,
                     patch_dim, temperature_init=0.07):
    D = transformer_width
    H = transformer_heads
    HD = D // H
    nl = transformer_layers
    keys = jax.random.split(key, 9)

    proj_std = (D ** -0.5) * ((2 * nl) ** -0.5)
    attn_std = D ** -0.5
    fc_std = (2 * D) ** -0.5

    # per-layer weights, stacked along a leading layer axis
    wqkv = attn_std * jax.random.normal(keys[0], (nl, D, 3 * D), jnp.float32)
    wq = wqkv[:, :, 0 * D:1 * D].reshape(nl, D, H, HD).transpose(0, 2, 1, 3)
    wk = wqkv[:, :, 1 * D:2 * D].reshape(nl, D, H, HD).transpose(0, 2, 1, 3)
    wv = wqkv[:, :, 2 * D:3 * D].reshape(nl, D, H, HD).transpose(0, 2, 1, 3)
    wo = (proj_std * jax.random.normal(keys[1], (nl, D, D), jnp.float32)
          ).reshape(nl, H, HD, D)
    wfc = fc_std * jax.random.normal(keys[2], (nl, D, 4 * D), jnp.float32)
    wproj = proj_std * jax.random.normal(keys[3], (nl, 4 * D, D), jnp.float32)

    bf = jnp.bfloat16
    blocks_stacked = (
        jnp.ones((nl, 1, D), jnp.float32),               # ln1_g
        jnp.zeros((nl, 1, D), jnp.float32),              # ln1_b
        wq.astype(bf), wk.astype(bf), wv.astype(bf),     # per-head QKV weights
        jnp.zeros((nl, H, 1, HD), jnp.float32),          # bq
        jnp.zeros((nl, H, 1, HD), jnp.float32),          # bk
        jnp.zeros((nl, H, 1, HD), jnp.float32),          # bv
        wo.astype(bf),                                   # per-head out-proj
        jnp.zeros((nl, 1, D), jnp.float32),              # bo
        jnp.ones((nl, 1, D), jnp.float32),               # ln2_g
        jnp.zeros((nl, 1, D), jnp.float32),              # ln2_b
        wfc.astype(bf),
        jnp.zeros((nl, 1, 4 * D), jnp.float32),          # bfc
        wproj.astype(bf),
        jnp.zeros((nl, 1, D), jnp.float32),              # bproj
    )

    params = {
        'token_emb': 0.02 * jax.random.normal(keys[4], (vocab_size, D), jnp.float32),
        'pos_emb': 0.01 * jax.random.normal(keys[5], (context_length, D), jnp.float32),
        'ln_final_g': jnp.ones((1, D), jnp.float32),
        'ln_final_b': jnp.zeros((1, D), jnp.float32),
        'image_projection': ((vision_width ** -0.5)
            * jax.random.normal(keys[6], (vision_width, embed_dim), jnp.float32)
            ).astype(bf),
        'text_projection': ((D ** -0.5)
            * jax.random.normal(keys[7], (D, embed_dim), jnp.float32)).astype(bf),
        'logit_scale': jnp.asarray(math.log(1.0 / temperature_init), jnp.float32),
        # synthetic vision tower (stands in for the injected vision_model)
        'patch_w': ((patch_dim ** -0.5)
            * jax.random.normal(keys[8], (patch_dim, vision_width), jnp.float32)
            ).astype(bf),
        'patch_b': jnp.zeros((1, vision_width), jnp.float32),
        'blocks_stacked': blocks_stacked,
        'num_layers': nl,
    }
    return params


def build_attention_mask(L):
    # large finite negative instead of -inf (safe under padding / max-subtraction)
    row = jnp.arange(L)[:, None]
    col = jnp.arange(L)[None, :]
    return jnp.where(col > row, -1e30, 0.0).astype(jnp.float32)


# -----------------------------------------------------------------------------
# CLIP forward
# -----------------------------------------------------------------------------
def extract_patches_nchw(image, patch):
    # image: (B, C, H, W) NCHW  ->  (B, num_patches, C*patch*patch)
    B, C, H, W = image.shape
    ph, pw = H // patch, W // patch
    x = image.reshape(B, C, ph, patch, pw, patch)
    x = jnp.transpose(x, (0, 2, 4, 1, 3, 5))
    return x.reshape(B, ph * pw, C * patch * patch)


def clip_forward(params, image, text, *, num_heads, patch, norm_embed=False):
    B = image.shape[0]
    Bt, L = text.shape
    D = params['token_emb'].shape[1]
    E = params['text_projection'].shape[1]

    # ---------------- encode_image ----------------
    patches = extract_patches_nchw(image.astype(jnp.float32), patch)
    image_embed = _call(
        vision_kernel,
        jax.ShapeDtypeStruct((B, E), jnp.float32),
        patches, params['patch_w'], params['patch_b'], params['image_projection'])

    # ---------------- encode_text ----------------
    x0 = jnp.take(params['token_emb'], text, axis=0) + params['pos_emb']  # (B,L,D)
    mask = build_attention_mask(L)
    x = run_transformer(x0, mask, params['blocks_stacked'],
                        num_heads=num_heads, num_layers=params['num_layers'])

    # EOT pooling: assumes EOT token has the largest id (true for CLIP tokenizer)
    eot_idx = jnp.argmax(text, axis=-1)                            # (B,)
    xe = jnp.take_along_axis(x, eot_idx[:, None, None], axis=1)[:, 0, :]  # (B, D)
    text_embed = _call(
        text_head_kernel,
        jax.ShapeDtypeStruct((Bt, E), jnp.float32),
        xe, params['ln_final_g'], params['ln_final_b'], params['text_projection'])

    if norm_embed:
        image_embed = image_embed / jnp.linalg.norm(image_embed, axis=-1, keepdims=True)
        text_embed = text_embed / jnp.linalg.norm(text_embed, axis=-1, keepdims=True)

    return {
        'image_embed': image_embed,
        'text_embed': text_embed,
        'logit_scale': jnp.exp(params['logit_scale']),
    }


# -----------------------------------------------------------------------------
if __name__ == "__main__":
    # Small, module-consistent config
    embed_dim = 16
    vision_width = 32
    context_length = 8
    vocab_size = 64
    transformer_width = 32
    transformer_heads = 4
    transformer_layers = 2
    patch = 8                            # 16x16 image -> 2x2 = 4 patches
    B, C, Himg, Wimg = 2, 3, 16, 16
    patch_dim = C * patch * patch

    key = jax.random.PRNGKey(0)
    k_param, k_img, k_txt = jax.random.split(key, 3)

    params = init_clip_params(
        k_param,
        embed_dim=embed_dim, vision_width=vision_width,
        context_length=context_length, vocab_size=vocab_size,
        transformer_width=transformer_width, transformer_heads=transformer_heads,
        transformer_layers=transformer_layers, patch_dim=patch_dim)

    image = jax.random.normal(k_img, (B, C, Himg, Wimg), jnp.float32)   # NCHW
    text = jax.random.randint(k_txt, (B, context_length), 0, vocab_size, jnp.int32)

    out = clip_forward(params, image, text,
                       num_heads=transformer_heads, patch=patch)
    jax.block_until_ready(out)

    assert out['image_embed'].shape == (B, embed_dim)
    assert out['text_embed'].shape == (B, embed_dim)
    assert bool(jnp.isfinite(out['image_embed']).all())
    assert bool(jnp.isfinite(out['text_embed']).all())
    assert bool(jnp.isfinite(out['logit_scale']))

    print("KERNEL_OK")
</pallas_src>

<mosaic_0001>
module attributes {stable_mosaic.version = 11 : i64} {
  func.func @vision_kernel(%arg0: memref<2x4x192xf32, #tpu.memory_space<vmem>>, %arg1: memref<192x32xbf16, #tpu.memory_space<vmem>>, %arg2: memref<1x32xf32, #tpu.memory_space<vmem>>, %arg3: memref<32x16xbf16, #tpu.memory_space<vmem>>, %arg4: memref<2x16xf32, #tpu.memory_space<vmem>>) attributes {dimension_semantics = [], scalar_prefetch = 0 : i64, scratch_operands = 0 : i64, tpu.core_type = #tpu.core_type<tc>} {
    %c0 = arith.constant 0 : index
    %c0_0 = arith.constant 0 : index
    %c0_1 = arith.constant 0 : index
    %0 = vector.load %arg0[%c0, %c0_0, %c0_1] : memref<2x4x192xf32, #tpu.memory_space<vmem>>, vector<2x4x192xf32>
    %1 = vector.shape_cast %0 : vector<2x4x192xf32> to vector<8x192xf32>
    %2 = arith.truncf %1 : vector<8x192xf32> to vector<8x192xbf16>
    %c0_2 = arith.constant 0 : index
    %c0_3 = arith.constant 0 : index
    %3 = vector.load %arg1[%c0_2, %c0_3] : memref<192x32xbf16, #tpu.memory_space<vmem>>, vector<192x32xbf16>
    %cst = arith.constant dense<0.000000e+00> : vector<8x32xf32>
    %4 = tpu.matmul %2, %3, %cst {dimension_numbers = #tpu.dot_dimension_numbers<[1], [0], [0], [1], [0, 0, 1, 1], [], []>} : vector<8x192xbf16>, vector<192x32xbf16>, vector<8x32xf32> -> vector<8x32xf32>
    %c0_4 = arith.constant 0 : index
    %c0_5 = arith.constant 0 : index
    %5 = vector.load %arg2[%c0_4, %c0_5] : memref<1x32xf32, #tpu.memory_space<vmem>>, vector<1x32xf32>
    %6 = vector.broadcast %5 : vector<1x32xf32> to vector<8x32xf32>
    %7 = arith.addf %4, %6 : vector<8x32xf32>
    %8 = vector.shape_cast %7 : vector<8x32xf32> to vector<2x4x32xf32>
    %cst_6 = arith.constant dense<0.000000e+00> : vector<2x32xf32>
    %9 = vector.multi_reduction <add>, %8, %cst_6 [1] : vector<2x4x32xf32> to vector<2x32xf32>
    %cst_7 = arith.constant 4.000000e+00 : f32
    %10 = vector.broadcast %cst_7 : f32 to vector<2x32xf32>
    %11 = arith.divf %9, %10 : vector<2x32xf32>
    %12 = arith.truncf %11 : vector<2x32xf32> to vector<2x32xbf16>
    %c0_8 = arith.constant 0 : index
    %c0_9 = arith.constant 0 : index
    %13 = vector.load %arg3[%c0_8, %c0_9] : memref<32x16xbf16, #tpu.memory_space<vmem>>, vector<32x16xbf16>
    %cst_10 = arith.constant dense<0.000000e+00> : vector<2x16xf32>
    %14 = tpu.matmul %12, %13, %cst_10 {dimension_numbers = #tpu.dot_dimension_numbers<[1], [0], [0], [1], [0, 0, 1, 1], [], []>} : vector<2x32xbf16>, vector<32x16xbf16>, vector<2x16xf32> -> vector<2x16xf32>
    %c0_11 = arith.constant 0 : index
    %c0_12 = arith.constant 0 : index
    %15 = vector.load %arg4[%c0_11, %c0_12] : memref<2x16xf32, #tpu.memory_space<vmem>>, vector<2x16xf32>
    tpu.vector_store %arg4[%c0_11, %c0_12], %14 {strides = array<i32>} : memref<2x16xf32, #tpu.memory_space<vmem>>, vector<2x16xf32>,
    return
  }
}

</mosaic_0001>

<llo_original>
// kernel: tpu_custom_call.1
$region0: #{tpu_custom_call.1}
  #allocation0 [shape = 'u32[]', space=smem, size = 0x4, offset = 0x4, fixed_abs, tag = 'smem constant byte address 0x4 - core index']
  #allocation1 [shape = 'u32[72,128]{1,0:T(1,128)}', space=vmem, size = 0x9000, scoped, tag = 'internal scratch']
  %s0 = inlined_call_operand.vmem [shape: f32[2,4,192], index: 0, kind: input, shape index: {}]
  %s1 = inlined_call_operand.vmem [shape: bf16[192,32], index: 1, kind: input, shape index: {}]
  %s2 = inlined_call_operand.vmem [shape: f32[1,32], index: 2, kind: input, shape index: {}]
  %s3 = inlined_call_operand.vmem [shape: bf16[32,16], index: 3, kind: input, shape index: {}]
  %s4 = inlined_call_operand.hbm [shape: f32[2,16], index: 4, kind: output, shape index: {}]
  %s5 = sld [smem:[#allocation0]]
  $region26: #{tpu_custom_call.1} parent=0
    _
  %s7 = ssub.s32 1, %s5
  %s8 = scalar_select 0, %s7, %s5
  $region1: #{tpu_custom_call.1} parent=0
    #allocation2 [shape = 'u8[1024]{0}', space=vmem, size = 0x400, scoped, tag = 'output window, operand 0, single buffered']
    #allocation3 [shape = 's32[1]{0}', space=sflag, size = 0x4, scoped, tag = 'scoped memory for tpu_custom_call.1']
    %9 = vsyncpa [#allocation3], 0
    // Predicated region
    $region2: #{tpu_custom_call.1} parent=1 // pred_check
      _
    $region3: #{tpu_custom_call.1} parent=1 // pred_check_branch
      %11 = sbr.rel (0) target = $region5
    $region4: #{tpu_custom_call.1} parent=1 // pred_region
      _
    $region5: #{tpu_custom_call.1} parent=1 // pred_fallthru
      _
    // Predicated region
    $region6: #{tpu_custom_call.1} parent=1 // pred_check
      _
    $region7: #{tpu_custom_call.1} parent=1 // pred_check_branch
      %13 = sbr.rel (0) target = $region9
    $region8: #{tpu_custom_call.1} parent=1 // pred_region
      _
    $region9: #{tpu_custom_call.1} parent=1 // pred_fallthru
      _
    // Predicated region
    $region10: #{tpu_custom_call.1} parent=1 // pred_check
      _
    $region11: #{tpu_custom_call.1} parent=1 // pred_check_branch
      %15 = sbr.rel (0) target = $region13
    $region12: #{tpu_custom_call.1} parent=1 // pred_region
      _
    $region13: #{tpu_custom_call.1} parent=1 // pred_fallthru
      _
    // Predicated region
    $region14: #{tpu_custom_call.1} parent=1 // pred_check
      _
    $region15: #{tpu_custom_call.1} parent=1 // pred_check_branch
      %17 = sbr.rel (0) target = $region17
    $region16: #{tpu_custom_call.1} parent=1 // pred_region
      _
    $region17: #{tpu_custom_call.1} parent=1 // pred_fallthru
      _
    %v19 = vld [vmem:[%s0] sm:$0xff]
    %v20 = vld [vmem:[%s0 + $0x8] sm:$0xff]
    %23 = vst [vmem:[#allocation1] ss:$2 sm:$0xff] %v19
    %s24 = scalar_lea.vmem [#allocation1], 1
    %25 = vst [vmem:[%s24] ss:$2 sm:$0xff] %v20
    %v26 = vld.sshfl [vmem:[#allocation1] sm:$0xff pattern:$0x75316420]
    %v27 = vld.sshfl [vmem:[#allocation1 + $0x8] sm:$0xff pattern:$0x75316420]
    %v30 = vpack.c.bf16 %v26, %v26
    %v31 = vpack.c.bf16 %v27, %v27
    %v32 = vld [vmem:[%s1] sm:$0xf]
    %v33 = vld [vmem:[%s1 + $0x4] sm:$0xf]
    %v34 = vld [vmem:[%s1 + $0x8] sm:$0xf]
    %v35 = vld [vmem:[%s1 + $0xc] sm:$0xf]
    %v36 = vld [vmem:[%s1 + $0x10] sm:$0xf]
    %v37 = vld [vmem:[%s1 + $0x14] sm:$0xf]
    %v38 = vld [vmem:[%s1 + $0x18] sm:$0xf]
    %v39 = vld [vmem:[%s1 + $0x1c] sm:$0xf]
    %v40 = vld [vmem:[%s1 + $0x20] sm:$0xf]
    %v41 = vld [vmem:[%s1 + $0x24] sm:$0xf]
    %v42 = vld [vmem:[%s1 + $0x28] sm:$0xf]
    %v43 = vld [vmem:[%s1 + $0x2c] sm:$0xf]
    %v44 = vld [vmem:[%s1 + $0x30] sm:$0xf]
    %v45 = vld [vmem:[%s1 + $0x34] sm:$0xf]
    %v46 = vld [vmem:[%s1 + $0x38] sm:$0xf]
    %v47 = vld [vmem:[%s1 + $0x3c] sm:$0xf]
    %v48 = vld [vmem:[%s1 + $0x40] sm:$0xf]
    %v49 = vld [vmem:[%s1 + $0x44] sm:$0xf]
    %v50 = vld [vmem:[%s1 + $0x48] sm:$0xf]
    %v51 = vld [vmem:[%s1 + $0x4c] sm:$0xf]
    %v52 = vld [vmem:[%s1 + $0x50] sm:$0xf]
    %v53 = vld [vmem:[%s1 + $0x54] sm:$0xf]
    %v54 = vld [vmem:[%s1 + $0x58] sm:$0xf]
    %v55 = vld [vmem:[%s1 + $0x5c] sm:$0xf]
    %v56 = vld [vmem:[%s2] sm:$0x1]
    %v58 = vperm.slane %v56, 0
    %v84 = vunpack.c.l.b16 %v32
    %v85 = vunpack.c.l.b16 %v33
    %v86 = vunpack.c.l.b16 %v34
    %v87 = vunpack.c.l.b16 %v35
    %v88 = vunpack.c.l.b16 %v36
    %v89 = vunpack.c.l.b16 %v37
    %v90 = vunpack.c.l.b16 %v38
    %v91 = vunpack.c.l.b16 %v39
    %v92 = vunpack.c.l.b16 %v40
    %v93 = vunpack.c.l.b16 %v41
    %v94 = vunpack.c.l.b16 %v42
    %v95 = vunpack.c.l.b16 %v43
    %v96 = vunpack.c.l.b16 %v44
    %v97 = vunpack.c.l.b16 %v45
    %v98 = vunpack.c.l.b16 %v46
    %v99 = vunpack.c.l.b16 %v47
    %v100 = vunpack.c.l.b16 %v48
    %v101 = vunpack.c.l.b16 %v49
    %v102 = vunpack.c.l.b16 %v50
    %v103 = vunpack.c.l.b16 %v51
    %v104 = vunpack.c.l.b16 %v52
    %v105 = vunpack.c.l.b16 %v53
    %v106 = vunpack.c.l.b16 %v54
    %v107 = vunpack.c.l.b16 %v55
    %v108 = vpack.c.b16 %v85, %v84
    %v109 = vpack.c.b16 %v87, %v86
    %v110 = vpack.c.b16 %v89, %v88
    %v111 = vpack.c.b16 %v91, %v90
    %v112 = vpack.c.b16 %v93, %v92
    %v113 = vpack.c.b16 %v95, %v94
    %v114 = vpack.c.b16 %v97, %v96
    %v115 = vpack.c.b16 %v99, %v98
    %v116 = vpack.c.b16 %v101, %v100
    %v117 = vpack.c.b16 %v103, %v102
    %v118 = vpack.c.b16 %v105, %v104
    %v119 = vpack.c.b16 %v107, %v106
    %vm132 = vcmask 523264
    %v134 = vsel %vm132, %v31, 0
    %136 = vmatpush.bf16.msra.mxu0 %v115
    %137 = vmatpush.bf16.msra.mxu0 %v114
    %138 = vmatpush.bf16.msra.mxu0 %v113
    %139 = vmatpush.bf16.msra.mxu0 %v112
    %140 = vmatpush.bf16.msra.mxu0 %v111
    %141 = vmatpush.bf16.msra.mxu0 %v110
    %142 = vmatpush.bf16.msra.mxu0 %v109
    %143 = vmatpush.bf16.msra.mxu0 %v108
    %144 = vmatmul.bf16.gmra.mxu0 %v30
    %v145 = vpop.f32.mrf.mxu0
    %v146 = vadd.f32 %v58, %v145
    %v147 = vpop.f32.mrf.mxu0
    %148 = vdwg.mxu0
    %149 = vmatpush.bf16.msra.mxu0 0
    %150 = vmatpush.bf16.msra.mxu0 0
    %151 = vmatpush.bf16.msra.mxu0 0
    %152 = vmatpush.bf16.msra.mxu0 0
    %153 = vmatpush.bf16.msra.mxu0 %v119
    %154 = vmatpush.bf16.msra.mxu0 %v118
    %155 = vmatpush.bf16.msra.mxu0 %v117
    %156 = vmatpush.bf16.msra.mxu0 %v116
    %157 = vmatmul.bf16.gmra.mxu0 %v134
    %v158 = vpop.f32.mrf.mxu0
    %v159 = vadd.f32 %v146, %v158
    %v160 = vpop.f32.mrf.mxu0
    %161 = vdwg.mxu0
    %v163 = vrot.slane %v159, 4
    %vm165 = vcmask 257024
    %v166 = vsel %vm165, %v159, 0.0
    %v167 = vrot.slane %v166, 4
    %v168 = vadd.f32 %v166, %v167
    %v169 = vrot.slane %v168, 2
    %v170 = vadd.f32 %v168, %v169
    %v171 = vrot.slane %v170, 1
    %v172 = vadd.f32 %v170, %v171
    %v173 = vsel %vm165, %v163, 0.0
    %v174 = vrot.slane %v173, 4
    %v175 = vadd.f32 %v173, %v174
    %v176 = vrot.slane %v175, 2
    %v177 = vadd.f32 %v175, %v176
    %v178 = vrot.slane %v177, 1
    %v179 = vadd.f32 %v177, %v178
    %v180 = vrcp.pop 4.0
    %v181 = vmul.f32 4.0, %v180
    %v182 = vsub.f32 1.0, %v181
    %v183 = vmul.f32 %v180, %v182
    %v184 = vadd.f32 %v180, %v183
    %vm185 = vweird.f32 %v180
    %v186 = vsel %vm185, %v180, %v184
    %v187 = vmul.f32 %v172, %v186
    %v188 = vmul.f32 %v179, %v186
    %v189 = vpack.c.bf16 %v187, %v187
    %v190 = vpack.c.bf16 %v188, %v188
    %v191 = vld [vmem:[%s3] sm:$0xf]
    %v192 = vld [vmem:[%s3 + $0x4] sm:$0xf]
    %v193 = vld [vmem:[%s3 + $0x8] sm:$0xf]
    %v194 = vld [vmem:[%s3 + $0xc] sm:$0xf]
    %v197 = vunpack.c.l.b16 %v189
    %v198 = vunpack.c.l.b16 %v190
    %vm199 = vcmask 1041409
    %v200 = vsel %vm199, %v198, %v197
    %v201 = vpack.c.b16 %v200, %v200
    %v206 = vunpack.c.l.b16 %v191
    %v207 = vunpack.c.l.b16 %v192
    %v208 = vunpack.c.l.b16 %v193
    %v209 = vunpack.c.l.b16 %v194
    %v210 = vpack.c.b16 %v207, %v206
    %v211 = vpack.c.b16 %v209, %v208
    %vm214 = vcmask 261120
    %v216 = vsel %vm214, %v201, 0
    %218 = vmatpush.bf16.msra.mxu0 0
    %219 = vmatpush.bf16.msra.mxu0 0
    %220 = vmatpush.bf16.msra.mxu0 0
    %221 = vmatpush.bf16.msra.mxu0 0
    %222 = vmatpush.bf16.msra.mxu0 0
    %223 = vmatpush.bf16.msra.mxu0 0
    %224 = vmatpush.bf16.msra.mxu0 %v211
    %225 = vmatpush.bf16.msra.mxu0 %v210
    %226 = vmatmul.bf16.gmra.mxu0 %v216
    %v227 = vpop.f32.mrf.mxu0
    %v228 = vadd.f32 0.0, %v227
    %v229 = vpop.f32.mrf.mxu0
    %230 = vdwg.mxu0
    %vm231 = vcmask 123904
    %232 = vst.msk [vmem:[#allocation2] sm:$0x3] %vm231, %v228
    // Predicated region
    $region18: #{tpu_custom_call.1} parent=1 // pred_check
      _
    $region19: #{tpu_custom_call.1} parent=1 // pred_check_branch
      %234 = sbr.rel (0) target = $region21
    $region20: #{tpu_custom_call.1} parent=1 // pred_region
      %236 = vsyncadd [#allocation3], 0
      %s238 = sshll.u32 [#allocation2], 4
      %s239 = int_to_ptr.vmem [resolvable:$true] %s238
      %s240 = sshll.u32 %s4, 4
      %s241 = int_to_ptr.hbm [resolvable:$true] %s240
      %243 = dma.vmem_to_hbm [thread:$0]  %s239, 32, %s241, [#allocation3]
    $region21: #{tpu_custom_call.1} parent=1 // pred_fallthru
      _
    // Predicated region
    $region22: #{tpu_custom_call.1} parent=1 // pred_check
      _
    $region23: #{tpu_custom_call.1} parent=1 // pred_check_branch
      %245 = sbr.rel (0) target = $region25
    $region24: #{tpu_custom_call.1} parent=1 // pred_region
      %247 = dma.done [#allocation3], 32
    $region25: #{tpu_custom_call.1} parent=1 // pred_fallthru
      _
    %248 = vsyncpa [#allocation3], 1

</llo_original>
